<compile_context>
chip_gen: v6e
topology: v6e:2x2x1
jax: 0.10.0
libtpu: 0.0.40
codegen_flags: <defaults>
</compile_context>

<pallas_src>
import functools

import jax
import jax.numpy as jnp
import numpy as np
from jax.experimental import pallas as pl
from jax.experimental.pallas import tpu as pltpu


# --------------------------------------------------------------------------
# Pallas kernel: per-pixel CE (ignore_index, reduction='none') + fused OHEM
# partial statistics (per-lane count / sum of losses above the threshold).
# --------------------------------------------------------------------------
def _ce_kernel(logits_ref, labels_ref, loss_ref, stats_ref, *,
               ignore_lb, thresh_val, hw, tile_p):
    # logits_ref: (C, TP) native dtype    labels_ref: (1, TP) int32
    # loss_ref:   (1, TP) f32             stats_ref:  (2, TP) f32 (accumulator)
    t = pl.program_id(1)

    x = logits_ref[...]                                      # (C, TP)
    lbl = labels_ref[...]                                    # (1, TP)

    # class max in the native dtype (max is exact); f32 upcast is fused into
    # the (x - m) pass feeding exp -- no standalone multi-consumer f32 copy.
    m = jnp.max(x, axis=0, keepdims=True)                    # (1, TP)
    xm = x.astype(jnp.float32) - m.astype(jnp.float32)       # (C, TP) f32, <= 0

    # log-sum-exp of the shifted logits (keep exp/sum accumulation in f32).
    lse = jnp.log(jnp.sum(jnp.exp(xm), axis=0, keepdims=True))   # (1, TP)

    # target-class (shifted) logit via select-sum; (C, 1) iota broadcasts over
    # lanes.  loss = (m + lse) - x[label] = lse - (x[label] - m).
    cls = jax.lax.broadcasted_iota(jnp.int32, (xm.shape[0], 1), 0)
    picked = jnp.sum(jnp.where(cls == lbl, xm, 0.0), axis=0, keepdims=True)

    loss = lse - picked                                      # (1, TP)

    # mask ignore-label pixels and the out-of-range lanes of a ragged tail
    # tile (no host-side padding of the pixel axis).
    pix = t * tile_p + jax.lax.broadcasted_iota(jnp.int32, lbl.shape, 1)
    in_range = pix < hw
    valid = (lbl != ignore_lb) & in_range
    lm = jnp.where(valid, loss, 0.0)
    loss_ref[...] = lm

    # fused OHEM partials: per-lane accumulators (reduced to scalars in JAX).
    # Ignored pixels carry loss 0 (same as PyTorch); OOB lanes are excluded.
    sel = (lm > thresh_val) & in_range

    @pl.when(t == 0)
    def _():
        stats_ref[...] = jnp.zeros_like(stats_ref)

    stats_ref[0:1, :] += jnp.where(sel, lm, 0.0)             # sum(loss > thresh)
    stats_ref[1:2, :] += sel.astype(jnp.float32)             # count(loss > thresh)


# --------------------------------------------------------------------------
# Tiling helpers
# --------------------------------------------------------------------------
def _round_up(x, m):
    return ((x + m - 1) // m) * m


def _pick_tile_p(num_classes, itemsize, hw, vmem_budget_bytes):
    """Largest lane tile (multiple of 128) whose working set fits the budget.

    Accounts for sublane padding (C rounded to the dtype's sublane multiple;
    (1,TP)/(2,TP) buffers rounded to 8 sublanes) and the in-kernel f32
    temporaries, not just raw I/O bytes.
    """
    sub = {4: 8, 2: 16, 1: 32}.get(itemsize, 8)
    c_in = _round_up(num_classes, sub)            # logits sublanes, input dtype
    c_f32 = _round_up(num_classes, 8)             # f32 temporaries sublanes
    # double-buffered pipeline I/O per lane:
    #   logits + labels(8 sub x i32) + loss(8 sub x f32) + stats(8 sub x f32)
    io_per_lane = 2 * (c_in * itemsize + 32 + 32 + 32)
    # in-kernel f32 temporaries: shifted-logits + exp slabs, ~4 (1,TP) temps
    tmp_per_lane = 2 * c_f32 * 4 + 4 * 32
    per_lane = io_per_lane + tmp_per_lane
    tile = (vmem_budget_bytes // per_lane) // 128 * 128
    tile = max(128, min(tile, 32 * 1024))          # ~16-32K lanes saturates HBM
    tile = min(tile, _round_up(hw, 128))           # never (much) bigger than image
    return int(tile)


# --------------------------------------------------------------------------
# Wrapper: per-pixel CE loss + fused >thresh statistics
# --------------------------------------------------------------------------
def _per_pixel_ce_with_stats(logits_nchw, labels_nhw, thresh_val, ignore_lb,
                             vmem_budget_bytes):
    """Returns (flat per-pixel loss (N*H*W,), sum(loss>thresh), count(loss>thresh))."""
    N, C, H, W = logits_nchw.shape
    HW = H * W

    # Free views: no transpose, no dtype change of the logits, no padding.
    logits = logits_nchw.reshape(N, C, HW)
    labels = labels_nhw.reshape(N, 1, HW).astype(jnp.int32)
    # (int16/uint8 labels from the caller would cut label traffic further;
    #  casting here would itself cost an HBM copy, so we keep the native i32.)

    itemsize = jnp.dtype(logits.dtype).itemsize
    tile_p = _pick_tile_p(C, itemsize, HW, vmem_budget_bytes)
    num_tiles = pl.cdiv(HW, tile_p)
    vmem_limit = int(min(max(32 * 1024 * 1024, 2 * vmem_budget_bytes),
                         48 * 1024 * 1024))

    kernel = functools.partial(_ce_kernel, ignore_lb=ignore_lb,
                               thresh_val=thresh_val, hw=HW, tile_p=tile_p)

    loss, stats = pl.pallas_call(
        kernel,
        out_shape=(
            jax.ShapeDtypeStruct((N, 1, HW), jnp.float32),       # per-pixel loss
            jax.ShapeDtypeStruct((N, 2, tile_p), jnp.float32),   # per-lane partials
        ),
        grid_spec=pltpu.PrefetchScalarGridSpec(
            num_scalar_prefetch=0,
            grid=(N, num_tiles),
            in_specs=[
                pl.BlockSpec((None, C, tile_p), lambda n, t: (n, 0, t)),
                pl.BlockSpec((None, 1, tile_p), lambda n, t: (n, 0, t)),
            ],
            out_specs=[
                pl.BlockSpec((None, 1, tile_p), lambda n, t: (n, 0, t)),
                # resident accumulator across the pixel-tile ("arbitrary") axis
                pl.BlockSpec((None, 2, tile_p), lambda n, t: (n, 0, 0)),
            ],
        ),
        compiler_params=pltpu.CompilerParams(
            dimension_semantics=("parallel", "arbitrary"),
            vmem_limit_bytes=vmem_limit,
        ),
    )(logits, labels)

    sum_gt = jnp.sum(stats[:, 0, :])                               # f32
    cnt = jnp.sum(stats[:, 1, :].astype(jnp.int32))                # exact int
    return loss.reshape(-1), sum_gt, cnt


# --------------------------------------------------------------------------
# OHEM selection glue (plain JAX): branch via exact count test; top_k only
# when the top-n_min branch is actually taken.
# --------------------------------------------------------------------------
def ohem_ce_loss(logits, labels, thresh, n_min, ignore_lb=255,
                 vmem_budget_bytes=16 * 1024 * 1024):
    """Mirrors OhemCELoss.forward (PyTorch NCHW logits, NHW int labels)."""
    thresh_val = float(-np.log(np.float32(thresh)))

    loss_flat, sum_gt, cnt = _per_pixel_ce_with_stats(
        logits, labels, thresh_val, ignore_lb, vmem_budget_bytes)

    def _mean_over_thresh(_):
        # taken only when cnt >= n_min + 1 >= 1
        return sum_gt / cnt.astype(jnp.float32)

    def _mean_top_nmin(_):
        vals, _ = jax.lax.top_k(loss_flat, n_min)
        return jnp.mean(vals)

    # sorted_loss[n_min] > thresh  <=>  count(loss > thresh) >= n_min + 1
    return jax.lax.cond(cnt >= n_min + 1, _mean_over_thresh, _mean_top_nmin, 0)


# --------------------------------------------------------------------------
# Pure-JAX reference of the PyTorch forward, for a sanity check.
# --------------------------------------------------------------------------
def _reference(logits, labels, thresh_val, n_min, ignore_lb=255):
    N, C, H, W = logits.shape
    x = jnp.transpose(logits, (0, 2, 3, 1)).reshape(-1, C).astype(jnp.float32)
    y = labels.reshape(-1).astype(jnp.int32)
    lse = jax.nn.logsumexp(x, axis=-1)
    picked = jnp.take_along_axis(
        x, jnp.clip(y, 0, C - 1)[:, None], axis=-1)[:, 0]
    loss = jnp.where(y != ignore_lb, lse - picked, 0.0)
    sorted_loss = jnp.sort(loss)[::-1]
    kth = sorted_loss[n_min]
    mask = sorted_loss > thresh_val
    mean_thresh = jnp.sum(jnp.where(mask, sorted_loss, 0.0)) / jnp.maximum(
        jnp.sum(mask), 1)
    mean_topk = jnp.mean(sorted_loss[:n_min])
    return jnp.where(kth > thresh_val, mean_thresh, mean_topk)


# --------------------------------------------------------------------------
# Demo / self-check
# --------------------------------------------------------------------------
if __name__ == "__main__":
    root_key = jax.random.PRNGKey(0)
    ignore_lb = 255

    def make_inputs(key, N, C, H, W):
        k1, k2, k3 = jax.random.split(key, 3)
        logits = jax.random.normal(k1, (N, C, H, W), dtype=jnp.float32) * 2.0
        labels = jax.random.randint(k2, (N, H, W), 0, C, dtype=jnp.int32)
        ignore_mask = jax.random.uniform(k3, (N, H, W)) < 0.1
        labels = jnp.where(ignore_mask, ignore_lb, labels)
        return logits, labels

    configs = [
        # default budget, HW a multiple of the tile (single clean tile)
        dict(N=2, C=4, H=16, W=16, thresh=0.7, budget=16 * 1024 * 1024),
        # tiny budget -> tile=128, 3 pixel tiles per batch, ragged tail masked
        dict(N=2, C=5, H=16, W=17, thresh=0.7, budget=64 * 1024),
        # very small thresh -> top-n_min branch exercised (lax.cond + top_k)
        dict(N=2, C=5, H=16, W=17, thresh=1e-4, budget=64 * 1024),
    ]

    for i, cfg in enumerate(configs):
        N, C, H, W = cfg["N"], cfg["C"], cfg["H"], cfg["W"]
        P = N * H * W
        n_min = P // 16
        logits, labels = make_inputs(jax.random.fold_in(root_key, i), N, C, H, W)

        fn = jax.jit(functools.partial(
            ohem_ce_loss, thresh=cfg["thresh"], n_min=n_min,
            ignore_lb=ignore_lb, vmem_budget_bytes=cfg["budget"]))
        out = jax.block_until_ready(fn(logits, labels))

        thresh_val = float(-np.log(np.float32(cfg["thresh"])))
        ref = _reference(logits, labels, thresh_val, n_min, ignore_lb)
        assert jnp.allclose(out, ref, rtol=1e-5, atol=1e-5), (i, out, ref)

    print("KERNEL_OK")
</pallas_src>

<mosaic_0001>
module attributes {stable_mosaic.version = 11 : i64} {
  func.func @_ce_kernel(%arg0: i32, %arg1: i32, %arg2: memref<1x4x256xf32, #tpu.memory_space<vmem>>, %arg3: memref<1x1x256xi32, #tpu.memory_space<vmem>>, %arg4: memref<1x1x256xf32, #tpu.memory_space<vmem>>, %arg5: memref<1x2x256xf32, #tpu.memory_space<vmem>>) attributes {dimension_semantics = [#tpu.dimension_semantics<parallel>, #tpu.dimension_semantics<arbitrary>], iteration_bounds = array<i64: 2, 1>, scalar_prefetch = 0 : i64, scratch_operands = 0 : i64, tpu.core_type = #tpu.core_type<tc>, window_params = [{transform_indices = @transform_0, window_bounds = array<i64: 1, 4, 256>}, {transform_indices = @transform_1, window_bounds = array<i64: 1, 1, 256>}, {transform_indices = @transform_2, window_bounds = array<i64: 1, 1, 256>}, {transform_indices = @transform_3, window_bounds = array<i64: 1, 2, 256>}]} {
    %c0 = arith.constant 0 : index
    %c0_0 = arith.constant 0 : index
    %c0_1 = arith.constant 0 : index
    %0 = vector.load %arg2[%c0, %c0_0, %c0_1] : memref<1x4x256xf32, #tpu.memory_space<vmem>>, vector<1x4x256xf32>
    %1 = vector.shape_cast %0 : vector<1x4x256xf32> to vector<4x256xf32>
    %c0_2 = arith.constant 0 : index
    %c0_3 = arith.constant 0 : index
    %c0_4 = arith.constant 0 : index
    %2 = vector.load %arg3[%c0_2, %c0_3, %c0_4] : memref<1x1x256xi32, #tpu.memory_space<vmem>>, vector<1x1x256xi32>
    %3 = vector.shape_cast %2 : vector<1x1x256xi32> to vector<1x256xi32>
    %cst = arith.constant dense<0xFF800000> : vector<256xf32>
    %4 = vector.multi_reduction <maximumf>, %1, %cst [0] : vector<4x256xf32> to vector<256xf32>
    %5 = vector.shape_cast %4 : vector<256xf32> to vector<1x256xf32>
    %6 = vector.broadcast %5 : vector<1x256xf32> to vector<4x256xf32>
    %7 = arith.subf %1, %6 : vector<4x256xf32>
    %8 = math.exp %7 : vector<4x256xf32>
    %cst_5 = arith.constant dense<0.000000e+00> : vector<256xf32>
    %9 = vector.multi_reduction <add>, %8, %cst_5 [0] : vector<4x256xf32> to vector<256xf32>
    %10 = vector.shape_cast %9 : vector<256xf32> to vector<1x256xf32>
    %11 = math.log %10 : vector<1x256xf32>
    %12 = tpu.iota {dimensions = array<i32: 0>} : vector<4x1xi32>
    %13 = vector.broadcast %12 : vector<4x1xi32> to vector<4x256xi32>
    %14 = vector.broadcast %3 : vector<1x256xi32> to vector<4x256xi32>
    %15 = arith.cmpi eq, %13, %14 : vector<4x256xi32>
    %cst_6 = arith.constant 0.000000e+00 : f32
    %16 = vector.broadcast %cst_6 : f32 to vector<4x256xf32>
    %17 = arith.select %15, %7, %16 : vector<4x256xi1>, vector<4x256xf32>
    %cst_7 = arith.constant dense<0.000000e+00> : vector<256xf32>
    %18 = vector.multi_reduction <add>, %17, %cst_7 [0] : vector<4x256xf32> to vector<256xf32>
    %19 = vector.shape_cast %18 : vector<256xf32> to vector<1x256xf32>
    %20 = arith.subf %11, %19 : vector<1x256xf32>
    %c256_i32 = arith.constant 256 : i32
    %21 = arith.muli %arg1, %c256_i32 : i32
    %22 = tpu.iota {dimensions = array<i32: 1>} : vector<1x256xi32>
    %23 = vector.broadcast %21 : i32 to vector<1x256xi32>
    %24 = arith.addi %23, %22 : vector<1x256xi32>
    %c256_i32_8 = arith.constant 256 : i32
    %25 = vector.broadcast %c256_i32_8 : i32 to vector<1x256xi32>
    %26 = arith.cmpi slt, %24, %25 : vector<1x256xi32>
    %c255_i32 = arith.constant 255 : i32
    %27 = vector.broadcast %c255_i32 : i32 to vector<1x256xi32>
    %28 = arith.cmpi ne, %3, %27 : vector<1x256xi32>
    %29 = arith.andi %28, %26 : vector<1x256xi1>
    %cst_9 = arith.constant 0.000000e+00 : f32
    %30 = vector.broadcast %cst_9 : f32 to vector<1x256xf32>
    %31 = arith.select %29, %20, %30 : vector<1x256xi1>, vector<1x256xf32>
    %c0_10 = arith.constant 0 : index
    %c0_11 = arith.constant 0 : index
    %c0_12 = arith.constant 0 : index
    %32 = vector.load %arg4[%c0_10, %c0_11, %c0_12] : memref<1x1x256xf32, #tpu.memory_space<vmem>>, vector<1x1x256xf32>
    %33 = vector.shape_cast %32 : vector<1x1x256xf32> to vector<1x256xf32>
    %34 = vector.shape_cast %31 : vector<1x256xf32> to vector<1x1x256xf32>
    tpu.vector_store %arg4[%c0_10, %c0_11, %c0_12], %34 {strides = array<i32>} : memref<1x1x256xf32, #tpu.memory_space<vmem>>, vector<1x1x256xf32>,
    %cst_13 = arith.constant 0.356674939 : f32
    %35 = vector.broadcast %cst_13 : f32 to vector<1x256xf32>
    %36 = arith.cmpf ogt, %31, %35 : vector<1x256xf32>
    %37 = arith.andi %36, %26 : vector<1x256xi1>
    %c0_i32 = arith.constant 0 : i32
    %38 = arith.cmpi eq, %arg1, %c0_i32 : i32
    %39 = arith.extui %38 : i1 to i32
    %c0_i32_14 = arith.constant 0 : i32
    %40 = arith.cmpi ne, %39, %c0_i32_14 : i32
    scf.if %40 {
      %cst_27 = arith.constant 0.000000e+00 : f32
      %57 = vector.broadcast %cst_27 : f32 to vector<2x256xf32>
      %c0_28 = arith.constant 0 : index
      %c0_29 = arith.constant 0 : index
      %c0_30 = arith.constant 0 : index
      %58 = vector.load %arg5[%c0_28, %c0_29, %c0_30] : memref<1x2x256xf32, #tpu.memory_space<vmem>>, vector<1x2x256xf32>
      %59 = vector.shape_cast %58 : vector<1x2x256xf32> to vector<2x256xf32>
      %60 = vector.shape_cast %57 : vector<2x256xf32> to vector<1x2x256xf32>
      tpu.vector_store %arg5[%c0_28, %c0_29, %c0_30], %60 {strides = array<i32>} : memref<1x2x256xf32, #tpu.memory_space<vmem>>, vector<1x2x256xf32>,
    } else {
    }
    %c0_15 = arith.constant 0 : index
    %c0_16 = arith.constant 0 : index
    %c0_17 = arith.constant 0 : index
    %41 = vector.load %arg5[%c0_15, %c0_16, %c0_17] : memref<1x2x256xf32, #tpu.memory_space<vmem>>, vector<1x1x256xf32>
    %42 = vector.shape_cast %41 : vector<1x1x256xf32> to vector<1x256xf32>
    %cst_18 = arith.constant 0.000000e+00 : f32
    %43 = vector.broadcast %cst_18 : f32 to vector<1x256xf32>
    %44 = arith.select %37, %31, %43 : vector<1x256xi1>, vector<1x256xf32>
    %45 = arith.addf %42, %44 : vector<1x256xf32>
    %c0_19 = arith.constant 0 : index
    %c0_20 = arith.constant 0 : index
    %c0_21 = arith.constant 0 : index
    %46 = vector.load %arg5[%c0_19, %c0_20, %c0_21] : memref<1x2x256xf32, #tpu.memory_space<vmem>>, vector<1x1x256xf32>
    %47 = vector.shape_cast %46 : vector<1x1x256xf32> to vector<1x256xf32>
    %48 = vector.shape_cast %45 : vector<1x256xf32> to vector<1x1x256xf32>
    tpu.vector_store %arg5[%c0_19, %c0_20, %c0_21], %48 {strides = array<i32>} : memref<1x2x256xf32, #tpu.memory_space<vmem>>, vector<1x1x256xf32>,
    %c0_22 = arith.constant 0 : index
    %c1 = arith.constant 1 : index
    %c0_23 = arith.constant 0 : index
    %49 = vector.load %arg5[%c0_22, %c1, %c0_23] : memref<1x2x256xf32, #tpu.memory_space<vmem>>, vector<1x1x256xf32>
    %50 = vector.shape_cast %49 : vector<1x1x256xf32> to vector<1x256xf32>
    %51 = arith.extui %37 : vector<1x256xi1> to vector<1x256xi32>
    %52 = arith.sitofp %51 : vector<1x256xi32> to vector<1x256xf32>
    %53 = arith.addf %50, %52 : vector<1x256xf32>
    %c0_24 = arith.constant 0 : index
    %c1_25 = arith.constant 1 : index
    %c0_26 = arith.constant 0 : index
    %54 = vector.load %arg5[%c0_24, %c1_25, %c0_26] : memref<1x2x256xf32, #tpu.memory_space<vmem>>, vector<1x1x256xf32>
    %55 = vector.shape_cast %54 : vector<1x1x256xf32> to vector<1x256xf32>
    %56 = vector.shape_cast %53 : vector<1x256xf32> to vector<1x1x256xf32>
    tpu.vector_store %arg5[%c0_24, %c1_25, %c0_26], %56 {strides = array<i32>} : memref<1x2x256xf32, #tpu.memory_space<vmem>>, vector<1x1x256xf32>,
    return
  }
  func.func @transform_0(%arg0: i32, %arg1: i32) -> (i32, i32, i32) {
    %c0_i32 = arith.constant 0 : i32
    %c0_i32_0 = arith.constant 0 : i32
    return %arg0, %c0_i32, %arg1 : i32, i32, i32
  }
  func.func @transform_1(%arg0: i32, %arg1: i32) -> (i32, i32, i32) {
    %c0_i32 = arith.constant 0 : i32
    %c0_i32_0 = arith.constant 0 : i32
    return %arg0, %c0_i32, %arg1 : i32, i32, i32
  }
  func.func @transform_2(%arg0: i32, %arg1: i32) -> (i32, i32, i32) {
    %c0_i32 = arith.constant 0 : i32
    %c0_i32_0 = arith.constant 0 : i32
    return %arg0, %c0_i32, %arg1 : i32, i32, i32
  }
  func.func @transform_3(%arg0: i32, %arg1: i32) -> (i32, i32, i32) {
    %c0_i32 = arith.constant 0 : i32
    %c0_i32_0 = arith.constant 0 : i32
    %c0_i32_1 = arith.constant 0 : i32
    return %arg0, %c0_i32, %c0_i32_0 : i32, i32, i32
  }
}

</mosaic_0001>

<llo_original>
// kernel: ohem_ce_loss.1
$region0: #{ohem_ce_loss.1}
  #allocation0 [shape = 'u32[]', space=smem, size = 0x4, offset = 0x4, fixed_abs, tag = 'smem constant byte address 0x4 - core index']
  #allocation1 [shape = 'u32[144,128]{1,0:T(1,128)}', space=vmem, size = 0x12000, scoped, tag = 'internal scratch']
  %s0 = inlined_call_operand.vmem [shape: f32[2,4,256], index: 0, kind: input, shape index: {}]
  %s1 = inlined_call_operand.vmem [shape: s32[2,1,256], index: 1, kind: input, shape index: {}]
  %s2 = inlined_call_operand.vmem [shape: f32[2,1,256], index: 2, kind: output, shape index: {0}]
  %s3 = inlined_call_operand.vmem [shape: f32[2,2,256], index: 3, kind: output, shape index: {1}]
  %4 = xla_tuple %s2, %s3
  %s5 = sld [smem:[#allocation0]]
  $region53: #{ohem_ce_loss.1} parent=0
    _
  %s7 = ssub.s32 1, %s5
  %s8 = scalar_select 0, %s7, %s5
  loop: start=0, step=1, limit=4
  $region2: #{ohem_ce_loss.1} parent=0 // loop_pre_header
    _
  $region3: #{ohem_ce_loss.1} parent=0 // loop_header
    %s10 = sphi 0, %s14
    %p11 = scmp.ge.s32.totalorder %s10, 4
    %s17 = sphi 0, %s29
    %s18 = sphi 0, %s25
    %s19 = sphi 0, %s17
    %s20 = sphi 0, %s18
    %s21 = sphi 0, %s19
    %s22 = sphi 0, %s20
    %s34 = sphi 0, %s36
    %s37 = sphi 0, %s34
    %s38 = sphi 0, %s37
    %s54 = sphi 0, %s38
    %s62 = sphi 0, %s64
    %s65 = sphi 0, %s62
    %s66 = sphi 0, %s65
    %s82 = sphi 0, %s66
    %s90 = sphi 0, %s92
    %s93 = sphi 0, %s90
    %s94 = sphi 0, %s93
    %s110 = sphi 0, %s94
    %s116 = sphi 0, %s118
    %s119 = sphi 0, %s116
    %s120 = sphi 0, %s119
    %s136 = sphi 0, %s120
  $region4: #{ohem_ce_loss.1} parent=0 // loop_header_branch
    %13 = sbr.rel (%p11) target = $region8
  $region5: #{ohem_ce_loss.1} parent=0 // loop_body
    %s15 = ssub.s32 %s10, 1
    %s16 = ssub.s32 %s10, 2
    %s23 = sadd.s32 1, %s18
    %p24 = scmp.ge.s32.totalorder %s23, 1
    %s25 = scalar_select %p24, 0, %s23
    %s26 = sadd.s32 1, %s17
    %s27 = scalar_select %p24, %s26, %s17
    %p28 = scmp.ge.s32.totalorder %s27, 2
    %s29 = scalar_select %p28, 0, %s27
    %s30 = ssub.s32 %s17, %s29
    %s31 = ssub.s32 %s18, %s25
    %s32 = sor.u32 %s30, %s31
    %p33 = scmp.eq.s32.totalorder %s32, 0
    %s35 = sadd.s32 %s34, 1
    %s36 = scalar_select %p33, %s34, %s35
    %p39 = pneg %p33
    %p40 = scmp.eq.s32.totalorder %s10, 1
    %p41 = por %p39, %p40
    %p42 = scmp.ne.s32.totalorder %s34, %s37
    %p43 = scmp.eq.s32.totalorder %s10, 0
    %p44 = por %p42, %p43
    %p45 = scmp.ne.s32.totalorder %s34, %s37
    %p46 = scmp.eq.s32.totalorder %s15, 1
    %p47 = por %p45, %p46
    %p48 = scmp.ne.s32.totalorder %s37, %s38
    %p49 = scmp.eq.s32.totalorder %s15, 0
    %p50 = por %p48, %p49
    %p51 = scmp.ne.s32.totalorder %s37, %s38
    %p52 = scmp.eq.s32.totalorder %s16, 1
    %p53 = por %p51, %p52
    %p55 = scmp.ne.s32.totalorder %s38, %s54
    %p56 = scmp.eq.s32.totalorder %s16, 0
    %p57 = por %p55, %p56
    %s58 = ssub.s32 %s17, %s29
    %s59 = ssub.s32 %s18, %s25
    %s60 = sor.u32 %s58, %s59
    %p61 = scmp.eq.s32.totalorder %s60, 0
    %s63 = sadd.s32 %s62, 1
    %s64 = scalar_select %p61, %s62, %s63
    %p67 = pneg %p61
    %p68 = scmp.eq.s32.totalorder %s10, 1
    %p69 = por %p67, %p68
    %p70 = scmp.ne.s32.totalorder %s62, %s65
    %p71 = scmp.eq.s32.totalorder %s10, 0
    %p72 = por %p70, %p71
    %p73 = scmp.ne.s32.totalorder %s62, %s65
    %p74 = scmp.eq.s32.totalorder %s15, 1
    %p75 = por %p73, %p74
    %p76 = scmp.ne.s32.totalorder %s65, %s66
    %p77 = scmp.eq.s32.totalorder %s15, 0
    %p78 = por %p76, %p77
    %p79 = scmp.ne.s32.totalorder %s65, %s66
    %p80 = scmp.eq.s32.totalorder %s16, 1
    %p81 = por %p79, %p80
    %p83 = scmp.ne.s32.totalorder %s66, %s82
    %p84 = scmp.eq.s32.totalorder %s16, 0
    %p85 = por %p83, %p84
    %s86 = ssub.s32 %s17, %s29
    %s87 = ssub.s32 %s18, %s25
    %s88 = sor.u32 %s86, %s87
    %p89 = scmp.eq.s32.totalorder %s88, 0
    %s91 = sadd.s32 %s90, 1
    %s92 = scalar_select %p89, %s90, %s91
    %p95 = pneg %p89
    %p96 = scmp.eq.s32.totalorder %s10, 1
    %p97 = por %p95, %p96
    %p98 = scmp.ne.s32.totalorder %s90, %s93
    %p99 = scmp.eq.s32.totalorder %s10, 0
    %p100 = por %p98, %p99
    %p101 = scmp.ne.s32.totalorder %s90, %s93
    %p102 = scmp.eq.s32.totalorder %s15, 1
    %p103 = por %p101, %p102
    %p104 = scmp.ne.s32.totalorder %s93, %s94
    %p105 = scmp.eq.s32.totalorder %s15, 0
    %p106 = por %p104, %p105
    %p107 = scmp.ne.s32.totalorder %s93, %s94
    %p108 = scmp.eq.s32.totalorder %s16, 1
    %p109 = por %p107, %p108
    %p111 = scmp.ne.s32.totalorder %s94, %s110
    %p112 = scmp.eq.s32.totalorder %s16, 0
    %p113 = por %p111, %p112
    %s114 = ssub.s32 %s17, %s29
    %p115 = scmp.eq.s32.totalorder %s114, 0
    %s117 = sadd.s32 %s116, 1
    %s118 = scalar_select %p115, %s116, %s117
    %p121 = pneg %p115
    %p122 = scmp.eq.s32.totalorder %s10, 1
    %p123 = por %p121, %p122
    %p124 = scmp.ne.s32.totalorder %s116, %s119
    %p125 = scmp.eq.s32.totalorder %s10, 0
    %p126 = por %p124, %p125
    %p127 = scmp.ne.s32.totalorder %s116, %s119
    %p128 = scmp.eq.s32.totalorder %s15, 1
    %p129 = por %p127, %p128
    %p130 = scmp.ne.s32.totalorder %s119, %s120
    %p131 = scmp.eq.s32.totalorder %s15, 0
    %p132 = por %p130, %p131
    %p133 = scmp.ne.s32.totalorder %s119, %s120
    %p134 = scmp.eq.s32.totalorder %s16, 1
    %p135 = por %p133, %p134
    %p137 = scmp.ne.s32.totalorder %s120, %s136
    %p138 = scmp.eq.s32.totalorder %s16, 0
    %p139 = por %p137, %p138
    %p140 = scmp.le.s32.totalorder 1, %s10
    %p141 = scmp.lt.s32.totalorder %s10, 3
    %p142 = pnand %p140, %p141
    %p143 = pneg %p142
    // Predicated region
    $region9: #{ohem_ce_loss.1} parent=5 // pred_check
      _
    $region10: #{ohem_ce_loss.1} parent=5 // pred_check_branch
      %145 = sbr.rel (%p142) target = $region12
    $region11: #{ohem_ce_loss.1} parent=5 // pred_region
      %s146 = ssub.s32 %s10, 1
    $region12: #{ohem_ce_loss.1} parent=5 // pred_fallthru
      _
    %p147 = scmp.lt.s32.totalorder %s10, 2
    // Predicated region
    $region13: #{ohem_ce_loss.1} parent=5 // pred_check
      %p148 = pneg %p147
    $region14: #{ohem_ce_loss.1} parent=5 // pred_check_branch
      %150 = sbr.rel (%p148) target = $region16
    $region15: #{ohem_ce_loss.1} parent=5 // pred_region
      // Predicated region
      $region17: #{ohem_ce_loss.1} parent=15 // pred_check
        %p151 = pneg %p44
      $region18: #{ohem_ce_loss.1} parent=15 // pred_check_branch
        %153 = sbr.rel (%p151) target = $region20
      $region19: #{ohem_ce_loss.1} parent=15 // pred_region
        %s154 = smul.u32 2, %s18
        %p155 = scmp.lt.s32.totalorder %s17, 1
        %s156 = scalar_select %p155, %s17, 1
        %p157 = scmp.lt.s32.totalorder %s154, 1
        %s158 = scalar_select %p157, %s154, 1
        %s159 = smul.addr %s156, 2
        %s160 = sadd.s32 %s158, %s159
        %s161 = smul.addr %s160, 4
        %s162 = scalar_lea.vmem %s0, %s161
        %s163 = smul.u32 2, %s18
      $region20: #{ohem_ce_loss.1} parent=15 // pred_fallthru
        _
      // Predicated region
      $region21: #{ohem_ce_loss.1} parent=15 // pred_check
        %p164 = pneg %p72
      $region22: #{ohem_ce_loss.1} parent=15 // pred_check_branch
        %166 = sbr.rel (%p164) target = $region24
      $region23: #{ohem_ce_loss.1} parent=15 // pred_region
        %s167 = smul.u32 2, %s18
        %p168 = scmp.lt.s32.totalorder %s17, 1
        %s169 = scalar_select %p168, %s17, 1
        %p170 = scmp.lt.s32.totalorder %s167, 1
        %s171 = scalar_select %p170, %s167, 1
        %s172 = smul.addr %s169, 2
        %s173 = sadd.s32 %s171, %s172
        %s174 = scalar_lea.vmem %s1, %s173
        %s175 = smul.u32 2, %s18
      $region24: #{ohem_ce_loss.1} parent=15 // pred_fallthru
        _
    $region16: #{ohem_ce_loss.1} parent=5 // pred_fallthru
      _
    %p176 = scmp.le.s32.totalorder 1, %s10
    %p177 = scmp.lt.s32.totalorder %s10, 3
    %p178 = pnand %p176, %p177
    %p179 = pneg %p178
    // Predicated region
    $region25: #{ohem_ce_loss.1} parent=5 // pred_check
      _
    $region26: #{ohem_ce_loss.1} parent=5 // pred_check_branch
      %181 = sbr.rel (%p178) target = $region28
    $region27: #{ohem_ce_loss.1} parent=5 // pred_region
      %s182 = ssub.s32 %s10, 1
      %s183 = smul.u32 2, %s20
      %p184 = scmp.lt.s32.totalorder %s19, 1
      %s185 = scalar_select %p184, %s19, 1
      %p186 = scmp.lt.s32.totalorder %s183, 1
      %s187 = scalar_select %p186, %s183, 1
      %s188 = smul.addr %s185, 2
      %s189 = sadd.s32 %s187, %s188
      %s190 = smul.addr %s189, 4
      %s191 = scalar_lea.vmem %s0, %s190
      %p192 = pneg %p50
      %p193 = pneg %p47
      %s194 = smul.u32 2, %s20
      %p195 = scmp.lt.s32.totalorder %s19, 1
      %s196 = scalar_select %p195, %s19, 1
      %p197 = scmp.lt.s32.totalorder %s194, 1
      %s198 = scalar_select %p197, %s194, 1
      %s199 = smul.addr %s196, 2
      %s200 = sadd.s32 %s198, %s199
      %s201 = scalar_lea.vmem %s1, %s200
      %p202 = pneg %p78
      %p203 = pneg %p75
      %p204 = pneg %p106
      %p205 = pneg %p103
      %s206 = smul.u32 2, %s20
      %p207 = scmp.lt.s32.totalorder %s19, 1
      %s208 = scalar_select %p207, %s19, 1
      %p209 = scmp.lt.s32.totalorder %s206, 1
      %s210 = scalar_select %p209, %s206, 1
      %s211 = smul.addr %s208, 2
      %s212 = sadd.s32 %s210, %s211
      %s213 = scalar_lea.vmem %s2, %s212
      %p214 = pneg %p132
      %p215 = pneg %p129
      %p216 = scmp.lt.s32.totalorder %s19, 1
      %s217 = scalar_select %p216, %s19, 1
      %s218 = smul.addr %s217, 2
      %s219 = smul.addr %s218, 2
      %s220 = scalar_lea.vmem %s3, %s219
      %s221 = smul.u32 2, %s20
      %p222 = scmp.lt.s32.totalorder %s19, 1
      %s223 = scalar_select %p222, %s19, 1
      %p224 = scmp.lt.s32.totalorder %s221, 1
      %s225 = scalar_select %p224, %s221, 1
      %s226 = smul.addr %s223, 2
      %s227 = sadd.s32 %s225, %s226
      %s228 = smul.addr %s227, 4
      %s229 = scalar_lea.vmem %s0, %s228
      %s230 = smul.u32 2, %s20
      %s231 = smul.u32 2, %s20
      %p232 = scmp.lt.s32.totalorder %s19, 1
      %s233 = scalar_select %p232, %s19, 1
      %p234 = scmp.lt.s32.totalorder %s231, 1
      %s235 = scalar_select %p234, %s231, 1
      %s236 = smul.addr %s233, 2
      %s237 = sadd.s32 %s235, %s236
      %s238 = scalar_lea.vmem %s1, %s237
      %s239 = smul.u32 2, %s20
      %s240 = smul.u32 2, %s20
      %p241 = scmp.lt.s32.totalorder %s19, 1
      %s242 = scalar_select %p241, %s19, 1
      %p243 = scmp.lt.s32.totalorder %s240, 1
      %s244 = scalar_select %p243, %s240, 1
      %s245 = smul.addr %s242, 2
      %s246 = sadd.s32 %s244, %s245
      %s247 = scalar_lea.vmem %s2, %s246
      %s248 = smul.u32 2, %s20
      %p249 = scmp.lt.s32.totalorder %s19, 1
      %s250 = scalar_select %p249, %s19, 1
      %s251 = smul.addr %s250, 2
      %s252 = smul.addr %s251, 2
      %s253 = scalar_lea.vmem %s3, %s252
      %v254 = vld [vmem:[%s229] sm:$0xff]
      %v255 = vld [vmem:[%s238] sm:$0x3]
      %v257 = vcombine.high %v254, %v254
      %vm259 = vcmask 1043456
      %v260 = vsel %vm259, %v254, -inf
      %v261 = vrot.slane %v260, 4
      %v262 = vmax.f32 %v260, %v261
      %v263 = vrot.slane %v262, 2
      %v264 = vmax.f32 %v262, %v263
      %v265 = vrot.slane %v264, 1
      %v266 = vmax.f32 %v264, %v265
      %v267 = vsel %vm259, %v257, -inf
      %v268 = vrot.slane %v267, 4
      %v269 = vmax.f32 %v267, %v268
      %v270 = vrot.slane %v269, 2
      %v271 = vmax.f32 %v269, %v270
      %v272 = vrot.slane %v271, 1
      %v273 = vmax.f32 %v271, %v272
      %v276 = vcombine.low %v266, %v273
      %v278 = vsub.f32 %v254, %v276
      %v279 = vmul.f32 %v278, 1.442695
      %v280 = vpow.pop %v279
      %v282 = vcombine.high %v280, %v280
      %v284 = vsel %vm259, %v280, 0.0
      %v285 = vrot.slane %v284, 4
      %v286 = vadd.f32 %v284, %v285
      %v287 = vrot.slane %v286, 2
      %v288 = vadd.f32 %v286, %v287
      %v289 = vrot.slane %v288, 1
      %v290 = vadd.f32 %v288, %v289
      %v291 = vsel %vm259, %v282, 0.0
      %v292 = vrot.slane %v291, 4
      %v293 = vadd.f32 %v291, %v292
      %v294 = vrot.slane %v293, 2
      %v295 = vadd.f32 %v293, %v294
      %v296 = vrot.slane %v295, 1
      %v297 = vadd.f32 %v295, %v296
      %v298 = vlog2.pop %v290
      %v299 = vmul.f32 %v298, 0.6931472
      %v300 = vlog2.pop %v297
      %v301 = vmul.f32 %v300, 0.6931472
      %v302 = vlaneseq
      %v303 = vshrl.u32 %v302, 7
      %v304 = vlaneseq
      %v305 = vshrl.u32 %v304, 7
      %v306 = vsub.s32 0, %v305
      %v307 = vrot.slane %v255, %v306
      %v308 = vlaneseq
      %v309 = vshrl.u32 %v308, 7
      %v310 = vsub.s32 1, %v309
      %v311 = vrot.slane %v255, %v310
      %vm312 = vcmp.eq.s32.totalorder %v303, %v307
      %vm313 = vcmp.eq.s32.totalorder %v303, %v311
      %v315 = vcombine.high %v278, %v278
      %v317 = vsel %vm312, %v278, 0.0
      %v318 = vsel %vm313, %v315, 0.0
      %v319 = vsel %vm259, %v317, 0.0
      %v320 = vrot.slane %v319, 4
      %v321 = vadd.f32 %v319, %v320
      %v322 = vrot.slane %v321, 2
      %v323 = vadd.f32 %v321, %v322
      %v324 = vrot.slane %v323, 1
      %v325 = vadd.f32 %v323, %v324
      %v326 = vsel %vm259, %v318, 0.0
      %v327 = vrot.slane %v326, 4
      %v328 = vadd.f32 %v326, %v327
      %v329 = vrot.slane %v328, 2
      %v330 = vadd.f32 %v328, %v329
      %v331 = vrot.slane %v330, 1
      %v332 = vadd.f32 %v330, %v331
      %v333 = vsub.f32 %v299, %v325
      %v334 = vsub.f32 %v301, %v332
      %s335 = smul.u32 %s20, 256
      %v336 = vlaneseq
      %v337 = vand.u32 %v336, 127
      %v338 = vadd.s32 %v337, 128
      %v339 = vstv %s335
      %v340 = vadd.s32 %v339, %v337
      %v341 = vadd.s32 %v339, %v338
      %vm342 = vcmp.lt.s32.totalorder %v340, 256
      %vm343 = vcmp.lt.s32.totalorder %v341, 256
      %vm344 = vcmp.ne.s32.totalorder %v255, 255
      %v345 = vsel %vm342, 1, 0
      %v346 = vsel %vm343, 1, 0
      %v347 = vcombine.low %v345, %v346
      %v349 = vunpack.c.l.s4 1966171168
      %v350 = vunpack.c.0.s8 %v349
      %v351 = vlaneseq
      %v352 = vshrl.u32 %v351, 7
      %v353 = vsub.s32 %v350, %v352
      %v354 = vrot.slane %v347, %v353
      %v356 = vunpack.c.l.s4 1966171168
      %v357 = vunpack.c.0.s8 %v356
      %v358 = vlaneseq
      %v359 = vshrl.u32 %v358, 7
      %v360 = vsub.s32 %v357, %v359
      %v361 = vrot.slane %v354, %v360
      %vm362 = vcmp.ne.s32.totalorder %v361, 0
      %vm363 = vmand %vm344, %vm362
      %v366 = vcombine.low %v333, %v334
      %v368 = vunpack.c.l.s4 1966171168
      %v369 = vunpack.c.0.s8 %v368
      %v370 = vlaneseq
      %v371 = vshrl.u32 %v370, 7
      %v372 = vsub.s32 %v369, %v371
      %v373 = vrot.slane %v366, %v372
      %v375 = vunpack.c.l.s4 1966171168
      %v376 = vunpack.c.0.s8 %v375
      %v377 = vlaneseq
      %v378 = vshrl.u32 %v377, 7
      %v379 = vsub.s32 %v376, %v378
      %v380 = vrot.slane %v373, %v379
      %v382 = vsel %vm363, %v380, 0.0
      %v383 = vlaneseq
      %vm384 = vcmp.ge.s32.totalorder %v383, 0
      %vm385 = vcmp.lt.s32.totalorder %v383, 256
      %vm386 = vmand %vm384, %vm385
      %387 = vst.msk [vmem:[%s247] sm:$0x3] %vm386, %v382
      %vm388 = vcmp.gt.f32.partialorder %v382, 0.35667494
      %vm389 = vmand %vm388, %vm362
      %p390 = scmp.eq.s32.totalorder %s20, 0
      // Predicated region
      $region29: #{ohem_ce_loss.1} parent=27 // pred_check
        %p391 = pneg %p390
      $region30: #{ohem_ce_loss.1} parent=27 // pred_check_branch
        %393 = sbr.rel (%p391) target = $region32
      $region31: #{ohem_ce_loss.1} parent=27 // pred_region
        %394 = vst [vmem:[%s253] sm:$0xf] 0.0
      $region32: #{ohem_ce_loss.1} parent=27 // pred_fallthru
        _
      %v395 = vld [vmem:[%s253] ss:$2 sm:$0x3]
      %v396 = vsel %vm389, %v382, 0.0
      %v397 = vadd.f32 %v395, %v396
      %398 = vst.msk [vmem:[%s253] ss:$2 sm:$0x3] %vm386, %v397
      %s399 = scalar_lea.vmem %s253, 1
      %v400 = vld [vmem:[%s399] ss:$2 sm:$0x3]
      %v401 = vsel %vm389, 1, 0
      %v402 = vcvt.s32.f32 %v401
      %v403 = vadd.f32 %v400, %v402
      %404 = vst.msk [vmem:[%s399] ss:$2 sm:$0x3] %vm386, %v403
      %s405 = smul.u32 2, %s20
      %p406 = scmp.lt.s32.totalorder %s19, 1
      %s407 = scalar_select %p406, %s19, 1
      %p408 = scmp.lt.s32.totalorder %s405, 1
      %s409 = scalar_select %p408, %s405, 1
      %s410 = smul.addr %s407, 2
      %s411 = sadd.s32 %s409, %s410
      %s412 = scalar_lea.vmem %s2, %s411
      %p413 = scmp.lt.s32.totalorder %s19, 1
      %s414 = scalar_select %p413, %s19, 1
      %s415 = smul.addr %s414, 2
      %s416 = smul.addr %s415, 2
      %s417 = scalar_lea.vmem %s3, %s416
      // Predicated region
      $region33: #{ohem_ce_loss.1} parent=27 // pred_check
        %p418 = pneg %p103
      $region34: #{ohem_ce_loss.1} parent=27 // pred_check_branch
        %420 = sbr.rel (%p418) target = $region36
      $region35: #{ohem_ce_loss.1} parent=27 // pred_region
        %s421 = smul.u32 2, %s20
      $region36: #{ohem_ce_loss.1} parent=27 // pred_fallthru
        _
      // Predicated region
      $region37: #{ohem_ce_loss.1} parent=27 // pred_check
        %p422 = pneg %p129
      $region38: #{ohem_ce_loss.1} parent=27 // pred_check_branch
        %424 = sbr.rel (%p422) target = $region40
      $region39: #{ohem_ce_loss.1} parent=27 // pred_region
        _
      $region40: #{ohem_ce_loss.1} parent=27 // pred_fallthru
        _
    $region28: #{ohem_ce_loss.1} parent=5 // pred_fallthru
      _
    %p425 = scmp.le.s32.totalorder 2, %s10
    // Predicated region
    $region41: #{ohem_ce_loss.1} parent=5 // pred_check
      %p426 = pneg %p425
    $region42: #{ohem_ce_loss.1} parent=5 // pred_check_branch
      %428 = sbr.rel (%p426) target = $region44
    $region43: #{ohem_ce_loss.1} parent=5 // pred_region
      %s429 = ssub.s32 %s10, 2
      // Predicated region
      $region45: #{ohem_ce_loss.1} parent=43 // pred_check
        %p430 = pneg %p109
      $region46: #{ohem_ce_loss.1} parent=43 // pred_check_branch
        %432 = sbr.rel (%p430) target = $region48
      $region47: #{ohem_ce_loss.1} parent=43 // pred_region
        %s433 = smul.u32 2, %s22
        %p434 = scmp.lt.s32.totalorder %s21, 1
        %s435 = scalar_select %p434, %s21, 1
        %p436 = scmp.lt.s32.totalorder %s433, 1
        %s437 = scalar_select %p436, %s433, 1
        %s438 = smul.addr %s435, 2
        %s439 = sadd.s32 %s437, %s438
        %s440 = scalar_lea.vmem %s2, %s439
      $region48: #{ohem_ce_loss.1} parent=43 // pred_fallthru
        _
      // Predicated region
      $region49: #{ohem_ce_loss.1} parent=43 // pred_check
        %p441 = pneg %p135
      $region50: #{ohem_ce_loss.1} parent=43 // pred_check_branch
        %443 = sbr.rel (%p441) target = $region52
      $region51: #{ohem_ce_loss.1} parent=43 // pred_region
        %p444 = scmp.lt.s32.totalorder %s21, 1
        %s445 = scalar_select %p444, %s21, 1
        %s446 = smul.addr %s445, 2
        %s447 = smul.addr %s446, 2
        %s448 = scalar_lea.vmem %s3, %s447
      $region52: #{ohem_ce_loss.1} parent=43 // pred_fallthru
        _
    $region44: #{ohem_ce_loss.1} parent=5 // pred_fallthru
      _
  $region6: #{ohem_ce_loss.1} parent=0 // loop_footer
    %s14 = sadd.s32 1, %s10
  $region7: #{ohem_ce_loss.1} parent=0 // loop_footer_branch
    %9 = sbr.rel target = $region3
  $region8: #{ohem_ce_loss.1} parent=0 // loop_exit
    _

</llo_original>
